<compile_context>
chip_gen: v7x
topology: tpu7x:2x2x1
jax: 0.10.0
libtpu: 0.0.40
codegen_flags: <defaults>
</compile_context>

<pallas_src>
import functools

import jax
import jax.numpy as jnp
from jax.experimental import pallas as pl
from jax.experimental.pallas import tpu as pltpu

LANES = 128
CHUNK_TARGET_ROWS = 512   # in-kernel compute chunk (multiple of every sublane count)


def _num_tensorcores_per_chip():
    """2 on v7x (megacore split), else 1.  Either value is always correct."""
    try:
        kind = jax.devices()[0].device_kind.lower()
    except Exception:
        return 1
    return 2 if "7" in kind else 1


def _mae_kernel(x_ref, y_ref, o_ref, *, chunk_rows, n_chunks,
                blocks_per_core, rows):
    c = pl.program_id(0)          # megacore split axis ("parallel")
    j = pl.program_id(1)          # row-block reduction axis ("arbitrary")
    tile_rows = chunk_rows * n_chunks

    # o_ref is the resident per-core (1, 8, 128) accumulator (its out-spec
    # block index (c, 0, 0) does not change across j): accumulate directly
    # into it -- no VMEM scratch, no epilogue copy.
    @pl.when(j == 0)
    def _():
        o_ref[...] = jnp.zeros_like(o_ref)

    rb = c * blocks_per_core + j          # intended (unclamped) block index
    base_row = rb * tile_rows             # first global row of this block
    full = base_row + tile_rows <= rows   # every row of the block is valid

    def chunk_partial(t, mask_fn):
        r0 = t * chunk_rows               # static python int -> free ref slice
        xs = x_ref[pl.ds(r0, chunk_rows), :].astype(jnp.float32)
        ys = y_ref[pl.ds(r0, chunk_rows), :].astype(jnp.float32)
        ad = jnp.abs(xs - ys)
        if mask_fn is not None:
            ad = jnp.where(mask_fn(r0), ad, 0.0)
        return jnp.sum(ad.reshape(chunk_rows // 8, 8, LANES), axis=0)

    @pl.when(full)
    def _():
        # Fast path: no masking at all, pure VPU adds into an (8, 128) vreg acc.
        acc = jnp.zeros((8, LANES), jnp.float32)
        for t in range(n_chunks):
            acc = acc + chunk_partial(t, None)
        o_ref[...] += acc[None]

    @pl.when(jnp.logical_not(full))
    def _():
        # Edge / duplicated-clamped block: row-level mask only.  The wrapper
        # guarantees the kernel sees a 128-aligned element count, so there is
        # never a partial lane row and no flat-index int32 overflow risk.
        row = jax.lax.broadcasted_iota(jnp.int32, (chunk_rows, LANES), 0)

        def mask_fn(r0):
            return (base_row + r0) + row < rows

        acc = jnp.zeros((8, LANES), jnp.float32)
        for t in range(n_chunks):
            acc = acc + chunk_partial(t, mask_fn)
        o_ref[...] += acc[None]


def mean_absolute_error_loss(inputs, targets, *, max_block_bytes=4 << 20):
    """Pallas TPU implementation of torch.nn.L1Loss() (mean reduction)."""
    assert inputs.shape == targets.shape, "inputs/targets must have equal shapes"
    n_elem = int(inputs.size)

    x = inputs.reshape(-1)
    y = targets.reshape(-1)
    if x.dtype != y.dtype:
        ct = jnp.promote_types(x.dtype, y.dtype)
        x = x.astype(ct)
        y = y.astype(ct)

    itemsize = jnp.dtype(x.dtype).itemsize
    sub = 8 * max(1, 4 // itemsize)       # sublane multiple for this dtype
    rows = n_elem // LANES                # full 128-lane rows

    # Tiny inputs: a kernel launch buys nothing.
    if rows < sub:
        return jnp.mean(jnp.abs(x.astype(jnp.float32) - y.astype(jnp.float32)))

    # --- tail handling: NO full-array jnp.pad -------------------------------
    main = rows * LANES
    if main != n_elem:
        # <128-element tail summed with plain jnp; the kernel only ever sees a
        # 128-aligned element count.  (The prefix slice may still materialize,
        # but it replaces the previous pad-copy of BOTH full arrays.)
        xt = jax.lax.slice(x, (main,), (n_elem,)).astype(jnp.float32)
        yt = jax.lax.slice(y, (main,), (n_elem,)).astype(jnp.float32)
        tail_sum = jnp.sum(jnp.abs(xt - yt))
        x = jax.lax.slice(x, (0,), (main,))
        y = jax.lax.slice(y, (0,), (main,))
    else:
        tail_sum = jnp.float32(0.0)

    x2 = x.reshape(rows, LANES)           # free bitcast reshape
    y2 = y.reshape(rows, LANES)

    # --- tiling -------------------------------------------------------------
    num_cores = _num_tensorcores_per_chip()

    # Big lane-dense DMA blocks (default ~4 MiB / input / pipeline buffer);
    # in-kernel compute is chunked so temps stay small regardless of tile size.
    gran = CHUNK_TARGET_ROWS if rows >= CHUNK_TARGET_ROWS else sub
    max_rows = max(gran, (max_block_bytes // (LANES * itemsize)) // gran * gran)
    per_core = pl.cdiv(pl.cdiv(rows, num_cores), gran) * gran  # >=1 real block/core
    rows_floor = (rows // gran) * gran    # keep block extent <= array extent
    tile_rows = max(gran, min(max_rows, per_core, rows_floor))

    if rows >= CHUNK_TARGET_ROWS:
        chunk_rows = CHUNK_TARGET_ROWS
        n_chunks = tile_rows // chunk_rows
    else:
        chunk_rows = tile_rows
        n_chunks = 1

    n_row_blocks = pl.cdiv(rows, tile_rows)
    blocks_per_core = pl.cdiv(n_row_blocks, num_cores)

    def in_index_map(c, j):
        rb = c * blocks_per_core + j
        # Clamp so the DMA never starts past the array end; such duplicated
        # blocks contribute exactly zero (fully masked inside the kernel).
        return (jnp.minimum(rb, n_row_blocks - 1), 0)

    tile_bytes = tile_rows * LANES * itemsize
    # 2 inputs x 2 pipeline buffers x tile, plus chunked-compute temps/margin.
    vmem_limit = max(32 << 20, 4 * tile_bytes + (8 << 20))

    kernel = functools.partial(
        _mae_kernel,
        chunk_rows=chunk_rows,
        n_chunks=n_chunks,
        blocks_per_core=blocks_per_core,
        rows=rows,
    )

    partials = pl.pallas_call(
        kernel,
        out_shape=jax.ShapeDtypeStruct((num_cores, 8, LANES), jnp.float32),
        grid_spec=pltpu.PrefetchScalarGridSpec(
            num_scalar_prefetch=0,
            grid=(num_cores, blocks_per_core),
            in_specs=[
                pl.BlockSpec((tile_rows, LANES), in_index_map),
                pl.BlockSpec((tile_rows, LANES), in_index_map),
            ],
            out_specs=pl.BlockSpec((1, 8, LANES), lambda c, j: (c, 0, 0)),
        ),
        compiler_params=pltpu.CompilerParams(
            dimension_semantics=("parallel", "arbitrary"),
            vmem_limit_bytes=vmem_limit,
        ),
    )(x2, y2)

    # Tiny (num_cores*8*128,) final reduction; divide by the ORIGINAL count.
    return (jnp.sum(partials) + tail_sum) / n_elem


# TODO(synk): adjust_learning_rate in the reference module is optimizer-side
# LR scheduling, not part of the forward pass; nothing to translate.


if __name__ == "__main__":
    key = jax.random.PRNGKey(0)
    k1, k2, k3, k4 = jax.random.split(key, 4)

    # NCHW-style inputs, small shapes: batch=2, channels=4, spatial=16x16.
    inputs = jax.random.normal(k1, (2, 4, 16, 16), dtype=jnp.float32)
    targets = jax.random.normal(k2, (2, 4, 16, 16), dtype=jnp.float32)

    loss = mean_absolute_error_loss(inputs, targets)
    jax.block_until_ready(loss)
    ref = jnp.mean(jnp.abs(inputs - targets))
    assert jnp.allclose(loss, ref, rtol=1e-5, atol=1e-6), (loss, ref)

    # Ragged element count (1500, not a multiple of 128): exercises the masked
    # edge block and the wrapper-side tail path (no full-array pad anymore).
    a = jax.random.normal(k3, (5, 300), dtype=jnp.float32)
    b = jax.random.normal(k4, (5, 300), dtype=jnp.float32)
    loss2 = mean_absolute_error_loss(a, b)
    jax.block_until_ready(loss2)
    ref2 = jnp.mean(jnp.abs(a - b))
    assert jnp.allclose(loss2, ref2, rtol=1e-5, atol=1e-6), (loss2, ref2)

    print("KERNEL_OK")
</pallas_src>

<mosaic_0001>
module attributes {stable_mosaic.version = 11 : i64} {
  func.func @_mae_kernel(%arg0: i32, %arg1: i32, %arg2: memref<16x128xf32, #tpu.memory_space<vmem>>, %arg3: memref<16x128xf32, #tpu.memory_space<vmem>>, %arg4: memref<1x8x128xf32, #tpu.memory_space<vmem>>) attributes {dimension_semantics = [#tpu.dimension_semantics<parallel>, #tpu.dimension_semantics<arbitrary>], iteration_bounds = array<i64: 1, 1>, scalar_prefetch = 0 : i64, scratch_operands = 0 : i64, tpu.core_type = #tpu.core_type<tc>, window_params = [{transform_indices = @transform_0, window_bounds = array<i64: 16, 128>}, {transform_indices = @transform_1, window_bounds = array<i64: 16, 128>}, {transform_indices = @transform_2, window_bounds = array<i64: 1, 8, 128>}]} {
    %c0_i32 = arith.constant 0 : i32
    %0 = arith.cmpi eq, %arg1, %c0_i32 : i32
    %1 = arith.extui %0 : i1 to i32
    %c0_i32_0 = arith.constant 0 : i32
    %2 = arith.cmpi ne, %1, %c0_i32_0 : i32
    scf.if %2 {
      %cst = arith.constant 0.000000e+00 : f32
      %13 = vector.broadcast %cst : f32 to vector<1x8x128xf32>
      %c0 = arith.constant 0 : index
      %c0_5 = arith.constant 0 : index
      %c0_6 = arith.constant 0 : index
      %14 = vector.load %arg4[%c0, %c0_5, %c0_6] : memref<1x8x128xf32, #tpu.memory_space<vmem>>, vector<1x8x128xf32>
      tpu.vector_store %arg4[%c0, %c0_5, %c0_6], %13 {strides = array<i32>} : memref<1x8x128xf32, #tpu.memory_space<vmem>>, vector<1x8x128xf32>,
    } else {
    }
    %c1_i32 = arith.constant 1 : i32
    %3 = arith.muli %arg0, %c1_i32 : i32
    %4 = arith.addi %3, %arg1 : i32
    %c16_i32 = arith.constant 16 : i32
    %5 = arith.muli %4, %c16_i32 : i32
    %c16_i32_1 = arith.constant 16 : i32
    %6 = arith.addi %5, %c16_i32_1 : i32
    %c16_i32_2 = arith.constant 16 : i32
    %7 = arith.cmpi sle, %6, %c16_i32_2 : i32
    %8 = arith.extui %7 : i1 to i32
    %c0_i32_3 = arith.constant 0 : i32
    %9 = arith.cmpi ne, %8, %c0_i32_3 : i32
    scf.if %9 {
      %cst = arith.constant 0.000000e+00 : f32
      %13 = vector.broadcast %cst : f32 to vector<8x128xf32>
      %c0 = arith.constant 0 : index
      %c0_5 = arith.constant 0 : index
      %14 = vector.load %arg2[%c0, %c0_5] : memref<16x128xf32, #tpu.memory_space<vmem>>, vector<16x128xf32>
      %c0_6 = arith.constant 0 : index
      %c0_7 = arith.constant 0 : index
      %15 = vector.load %arg3[%c0_6, %c0_7] : memref<16x128xf32, #tpu.memory_space<vmem>>, vector<16x128xf32>
      %16 = arith.subf %14, %15 : vector<16x128xf32>
      %17 = math.absf %16 : vector<16x128xf32>
      %18 = vector.shape_cast %17 : vector<16x128xf32> to vector<2x8x128xf32>
      %cst_8 = arith.constant dense<0.000000e+00> : vector<8x128xf32>
      %19 = vector.multi_reduction <add>, %18, %cst_8 [0] : vector<2x8x128xf32> to vector<8x128xf32>
      %20 = arith.addf %13, %19 : vector<8x128xf32>
      %c0_9 = arith.constant 0 : index
      %c0_10 = arith.constant 0 : index
      %c0_11 = arith.constant 0 : index
      %21 = vector.load %arg4[%c0_9, %c0_10, %c0_11] : memref<1x8x128xf32, #tpu.memory_space<vmem>>, vector<1x8x128xf32>
      %22 = vector.shape_cast %20 : vector<8x128xf32> to vector<1x8x128xf32>
      %23 = arith.addf %21, %22 : vector<1x8x128xf32>
      %c0_12 = arith.constant 0 : index
      %c0_13 = arith.constant 0 : index
      %c0_14 = arith.constant 0 : index
      %24 = vector.load %arg4[%c0_12, %c0_13, %c0_14] : memref<1x8x128xf32, #tpu.memory_space<vmem>>, vector<1x8x128xf32>
      tpu.vector_store %arg4[%c0_12, %c0_13, %c0_14], %23 {strides = array<i32>} : memref<1x8x128xf32, #tpu.memory_space<vmem>>, vector<1x8x128xf32>,
    } else {
    }
    %true = arith.constant true
    %10 = arith.xori %7, %true : i1
    %11 = arith.extui %10 : i1 to i32
    %c0_i32_4 = arith.constant 0 : i32
    %12 = arith.cmpi ne, %11, %c0_i32_4 : i32
    scf.if %12 {
      %13 = tpu.iota {dimensions = array<i32: 0>} : vector<16x128xi32>
      %cst = arith.constant 0.000000e+00 : f32
      %14 = vector.broadcast %cst : f32 to vector<8x128xf32>
      %c0 = arith.constant 0 : index
      %c0_5 = arith.constant 0 : index
      %15 = vector.load %arg2[%c0, %c0_5] : memref<16x128xf32, #tpu.memory_space<vmem>>, vector<16x128xf32>
      %c0_6 = arith.constant 0 : index
      %c0_7 = arith.constant 0 : index
      %16 = vector.load %arg3[%c0_6, %c0_7] : memref<16x128xf32, #tpu.memory_space<vmem>>, vector<16x128xf32>
      %17 = arith.subf %15, %16 : vector<16x128xf32>
      %18 = math.absf %17 : vector<16x128xf32>
      %c0_i32_8 = arith.constant 0 : i32
      %19 = arith.addi %5, %c0_i32_8 : i32
      %20 = vector.broadcast %19 : i32 to vector<16x128xi32>
      %21 = arith.addi %20, %13 : vector<16x128xi32>
      %c16_i32_9 = arith.constant 16 : i32
      %22 = vector.broadcast %c16_i32_9 : i32 to vector<16x128xi32>
      %23 = arith.cmpi slt, %21, %22 : vector<16x128xi32>
      %cst_10 = arith.constant 0.000000e+00 : f32
      %24 = vector.broadcast %cst_10 : f32 to vector<16x128xf32>
      %25 = arith.select %23, %18, %24 : vector<16x128xi1>, vector<16x128xf32>
      %26 = vector.shape_cast %25 : vector<16x128xf32> to vector<2x8x128xf32>
      %cst_11 = arith.constant dense<0.000000e+00> : vector<8x128xf32>
      %27 = vector.multi_reduction <add>, %26, %cst_11 [0] : vector<2x8x128xf32> to vector<8x128xf32>
      %28 = arith.addf %14, %27 : vector<8x128xf32>
      %c0_12 = arith.constant 0 : index
      %c0_13 = arith.constant 0 : index
      %c0_14 = arith.constant 0 : index
      %29 = vector.load %arg4[%c0_12, %c0_13, %c0_14] : memref<1x8x128xf32, #tpu.memory_space<vmem>>, vector<1x8x128xf32>
      %30 = vector.shape_cast %28 : vector<8x128xf32> to vector<1x8x128xf32>
      %31 = arith.addf %29, %30 : vector<1x8x128xf32>
      %c0_15 = arith.constant 0 : index
      %c0_16 = arith.constant 0 : index
      %c0_17 = arith.constant 0 : index
      %32 = vector.load %arg4[%c0_15, %c0_16, %c0_17] : memref<1x8x128xf32, #tpu.memory_space<vmem>>, vector<1x8x128xf32>
      tpu.vector_store %arg4[%c0_15, %c0_16, %c0_17], %31 {strides = array<i32>} : memref<1x8x128xf32, #tpu.memory_space<vmem>>, vector<1x8x128xf32>,
    } else {
    }
    return
  }
  func.func @transform_0(%arg0: i32, %arg1: i32) -> (i32, i32) {
    %c1_i32 = arith.constant 1 : i32
    %0 = arith.muli %arg0, %c1_i32 : i32
    %1 = arith.addi %0, %arg1 : i32
    %c0_i32 = arith.constant 0 : i32
    %2 = arith.minsi %1, %c0_i32 : i32
    %c0_i32_0 = arith.constant 0 : i32
    %c0_i32_1 = arith.constant 0 : i32
    return %2, %c0_i32_0 : i32, i32
  }
  func.func @transform_1(%arg0: i32, %arg1: i32) -> (i32, i32) {
    %c1_i32 = arith.constant 1 : i32
    %0 = arith.muli %arg0, %c1_i32 : i32
    %1 = arith.addi %0, %arg1 : i32
    %c0_i32 = arith.constant 0 : i32
    %2 = arith.minsi %1, %c0_i32 : i32
    %c0_i32_0 = arith.constant 0 : i32
    %c0_i32_1 = arith.constant 0 : i32
    return %2, %c0_i32_0 : i32, i32
  }
  func.func @transform_2(%arg0: i32, %arg1: i32) -> (i32, i32, i32) {
    %c0_i32 = arith.constant 0 : i32
    %c0_i32_0 = arith.constant 0 : i32
    %c0_i32_1 = arith.constant 0 : i32
    return %arg0, %c0_i32, %c0_i32_0 : i32, i32, i32
  }
}

</mosaic_0001>

<llo_original>
// kernel: tpu_custom_call.1
$region0: #{tpu_custom_call.1}
  #allocation0 [shape = 'u32[]', space=smem, size = 0x4, offset = 0x4, fixed_abs, tag = 'smem constant byte address 0x4 - core index']
  #allocation1 [shape = 'u32[144,128]{1,0:T(1,128)}', space=vmem, size = 0x12000, scoped, tag = 'internal scratch']
  %s0 = inlined_call_operand.hbm [shape: f32[16,128], index: 0, kind: input, shape index: {}]
  %s1 = inlined_call_operand.hbm [shape: f32[16,128], index: 1, kind: input, shape index: {}]
  %s2 = inlined_call_operand.hbm [shape: f32[1,8,128], index: 2, kind: output, shape index: {}]
  %s3 = sld [smem:[#allocation0]]
  $region38: #{tpu_custom_call.1} parent=0
    _
  %s5 = ssub.s32 1, %s3
  %s6 = scalar_select 0, %s5, %s3
  $region1: #{tpu_custom_call.1} parent=0
    #allocation2 [shape = 'u8[8192]{0}', space=vmem, size = 0x2000, scoped, tag = 'input window, operand 0, single buffered']
    #allocation3 [shape = 's32[1]{0}', space=sflag, size = 0x4, scoped, tag = 'scoped memory for tpu_custom_call.1']
    #allocation4 [shape = 's32[1]{0}', space=sflag, size = 0x4, scoped, tag = 'scoped memory for tpu_custom_call.1']
    #allocation5 [shape = 'u8[8192]{0}', space=vmem, size = 0x2000, scoped, tag = 'input window, operand 1, single buffered']
    #allocation6 [shape = 's32[1]{0}', space=sflag, size = 0x4, scoped, tag = 'scoped memory for tpu_custom_call.1']
    #allocation7 [shape = 'u8[4096]{0}', space=vmem, size = 0x1000, scoped, tag = 'output window, operand 0, single buffered']
    %7 = vsyncpa [#allocation3], 0
    %8 = vsyncpa [#allocation6], 0
    %9 = vsyncpa [#allocation4], 0
    // Predicated region
    $region2: #{tpu_custom_call.1} parent=1 // pred_check
      _
    $region3: #{tpu_custom_call.1} parent=1 // pred_check_branch
      %11 = sbr.rel (0) target = $region5
    $region4: #{tpu_custom_call.1} parent=1 // pred_region
      %s12 = sadd.s32 0, 0
      %p13 = scmp.lt.s32.totalorder %s12, 0
      %s14 = scalar_select %p13, %s12, 0
      %s15 = smul.u32 2, %s14
      %s17 = ssub.s32 256, 256
      %18 = vsyncadd [#allocation3], %s17
      %s19 = smul.addr %s15, 128
      %s20 = scalar_lea.hbm %s0, %s19
      %s21 = sshll.u32 [#allocation2], 4
      %s22 = int_to_ptr.vmem [resolvable:$true] %s21
      %27 = dma.hbm_to_vmem [thread:$0]  %s20, 256, %s22, [#allocation3], 128, 128, 8
    $region5: #{tpu_custom_call.1} parent=1 // pred_fallthru
      _
    // Predicated region
    $region6: #{tpu_custom_call.1} parent=1 // pred_check
      _
    $region7: #{tpu_custom_call.1} parent=1 // pred_check_branch
      %29 = sbr.rel (0) target = $region9
    $region8: #{tpu_custom_call.1} parent=1 // pred_region
      %s30 = sadd.s32 0, 0
      %p31 = scmp.lt.s32.totalorder %s30, 0
      %s32 = scalar_select %p31, %s30, 0
      %s33 = smul.u32 2, %s32
      %s35 = ssub.s32 256, 256
      %36 = vsyncadd [#allocation6], %s35
      %s37 = smul.addr %s33, 128
      %s38 = scalar_lea.hbm %s1, %s37
      %s39 = sshll.u32 [#allocation5], 4
      %s40 = int_to_ptr.vmem [resolvable:$true] %s39
      %45 = dma.hbm_to_vmem [thread:$0]  %s38, 256, %s40, [#allocation6], 128, 128, 8
    $region9: #{tpu_custom_call.1} parent=1 // pred_fallthru
      _
    // Predicated region
    $region10: #{tpu_custom_call.1} parent=1 // pred_check
      _
    $region11: #{tpu_custom_call.1} parent=1 // pred_check_branch
      %47 = sbr.rel (0) target = $region13
    $region12: #{tpu_custom_call.1} parent=1 // pred_region
      %48 = dma.done [#allocation3], 256
    $region13: #{tpu_custom_call.1} parent=1 // pred_fallthru
      _
    // Predicated region
    $region14: #{tpu_custom_call.1} parent=1 // pred_check
      _
    $region15: #{tpu_custom_call.1} parent=1 // pred_check_branch
      %50 = sbr.rel (0) target = $region17
    $region16: #{tpu_custom_call.1} parent=1 // pred_region
      %51 = dma.done [#allocation6], 256
    $region17: #{tpu_custom_call.1} parent=1 // pred_fallthru
      _
    %s52 = sadd.s32 0, 0
    %p53 = scmp.lt.s32.totalorder %s52, 0
    %s54 = scalar_select %p53, %s52, 0
    %s55 = smul.u32 2, %s54
    %s56 = sadd.s32 0, 0
    %p57 = scmp.lt.s32.totalorder %s56, 0
    %s58 = scalar_select %p57, %s56, 0
    %s59 = smul.u32 2, %s58
    %p60 = scmp.eq.s32.totalorder 0, 0
    // Predicated region
    $region18: #{tpu_custom_call.1} parent=1 // pred_check
      %p61 = pneg %p60
    $region19: #{tpu_custom_call.1} parent=1 // pred_check_branch
      %63 = sbr.rel (%p61) target = $region21
    $region20: #{tpu_custom_call.1} parent=1 // pred_region
      %64 = vst [vmem:[#allocation7] sm:$0xff] 0.0
    $region21: #{tpu_custom_call.1} parent=1 // pred_fallthru
      _
    %s65 = sadd.s32 0, 0
    %s66 = smul.u32 %s65, 16
    %s67 = sadd.s32 %s66, 16
    %p68 = scmp.le.s32.totalorder %s67, 16
    // Predicated region
    $region22: #{tpu_custom_call.1} parent=1 // pred_check
      %p69 = pneg %p68
    $region23: #{tpu_custom_call.1} parent=1 // pred_check_branch
      %71 = sbr.rel (%p69) target = $region25
    $region24: #{tpu_custom_call.1} parent=1 // pred_region
      %v72 = vld [vmem:[#allocation2] sm:$0xff]
      %v73 = vld [vmem:[#allocation2 + $0x8] sm:$0xff]
      %v74 = vld [vmem:[#allocation5] sm:$0xff]
      %v75 = vld [vmem:[#allocation5 + $0x8] sm:$0xff]
      %v76 = vsub.f32 %v72, %v74
      %v77 = vsub.f32 %v73, %v75
      %v78 = vand.u32 2147483647, %v76
      %v79 = vand.u32 2147483647, %v77
      %v80 = vadd.f32 %v78, %v79
      %v81 = vadd.f32 %v80, 0.0
      %v82 = vld [vmem:[#allocation7] sm:$0xff]
      %v83 = vadd.f32 %v82, %v81
      %84 = vst [vmem:[#allocation7] sm:$0xff] %v83
    $region25: #{tpu_custom_call.1} parent=1 // pred_fallthru
      _
    %p85 = scmp.gt.s32.totalorder %s67, 16
    // Predicated region
    $region26: #{tpu_custom_call.1} parent=1 // pred_check
      %p86 = pneg %p85
    $region27: #{tpu_custom_call.1} parent=1 // pred_check_branch
      %88 = sbr.rel (%p86) target = $region29
    $region28: #{tpu_custom_call.1} parent=1 // pred_region
      %v89 = vlaneseq
      %v90 = vshrl.u32 %v89, 7
      %v91 = vadd.s32 %v90, 8
      %v92 = vld [vmem:[#allocation2] sm:$0xff]
      %v93 = vld [vmem:[#allocation2 + $0x8] sm:$0xff]
      %v94 = vld [vmem:[#allocation5] sm:$0xff]
      %v95 = vld [vmem:[#allocation5 + $0x8] sm:$0xff]
      %v96 = vsub.f32 %v92, %v94
      %v97 = vsub.f32 %v93, %v95
      %v98 = vand.u32 2147483647, %v96
      %v99 = vand.u32 2147483647, %v97
      %v100 = vstv %s66
      %v101 = vadd.s32 %v100, %v90
      %v102 = vadd.s32 %v100, %v91
      %vm103 = vcmp.lt.s32.totalorder %v101, 16
      %vm104 = vcmp.lt.s32.totalorder %v102, 16
      %v105 = vsel %vm103, %v98, 0.0
      %v106 = vsel %vm104, %v99, 0.0
      %v107 = vadd.f32 %v105, %v106
      %v108 = vadd.f32 %v107, 0.0
      %v109 = vld [vmem:[#allocation7] sm:$0xff]
      %v110 = vadd.f32 %v109, %v108
      %111 = vst [vmem:[#allocation7] sm:$0xff] %v110
    $region29: #{tpu_custom_call.1} parent=1 // pred_fallthru
      _
    // Predicated region
    $region30: #{tpu_custom_call.1} parent=1 // pred_check
      _
    $region31: #{tpu_custom_call.1} parent=1 // pred_check_branch
      %113 = sbr.rel (0) target = $region33
    $region32: #{tpu_custom_call.1} parent=1 // pred_region
      %s115 = ssub.s32 128, 128
      %116 = vsyncadd [#allocation4], %s115
      %s118 = sshll.u32 [#allocation7], 4
      %s119 = int_to_ptr.vmem [resolvable:$true] %s118
      %121 = dma.vmem_to_hbm [thread:$0]  %s119, 128, %s2, [#allocation4]
    $region33: #{tpu_custom_call.1} parent=1 // pred_fallthru
      _
    // Predicated region
    $region34: #{tpu_custom_call.1} parent=1 // pred_check
      _
    $region35: #{tpu_custom_call.1} parent=1 // pred_check_branch
      %123 = sbr.rel (0) target = $region37
    $region36: #{tpu_custom_call.1} parent=1 // pred_region
      %124 = dma.done [#allocation4], 128
    $region37: #{tpu_custom_call.1} parent=1 // pred_fallthru
      _
    %125 = vsyncpa [#allocation3], 1
    %126 = vsyncpa [#allocation6], 1
    %127 = vsyncpa [#allocation4], 1

</llo_original>
